<compile_context>
chip_gen: v5e
topology: v5e:2x2
jax: 0.10.0
libtpu: 0.0.40
codegen_flags: <defaults>
</compile_context>

<pallas_src>
import functools

import jax
import jax.numpy as jnp
from jax.experimental import pallas as pl
from jax.experimental.pallas import tpu as pltpu

_MIB = 1024 * 1024


# --------------------------------------------------------------------------
# Per-generation VMEM budget + tile selection
# --------------------------------------------------------------------------

def _vmem_budget():
    """Returns (block_byte_budget, vmem_limit_bytes) for this TPU generation."""
    try:
        phys = int(pltpu.get_tpu_info().vmem_capacity_bytes)
    except Exception:
        phys = 64 * _MIB          # conservative (v7x-sized) fallback
    if phys >= 100 * _MIB:        # v5e / v6e: 128 MiB physical VMEM
        return 8 * _MIB, 80 * _MIB
    return 5 * _MIB, 44 * _MIB    # v7x: 64 MiB physical VMEM


def _choose_tiles(C, HW, itemsize, block_bytes):
    """Pick (TC, THW): channels on sublanes, H*W on lanes.

    TC first (bounded by C, split so the parallel channel axis has extent >=2
    when the data is large enough), then THW grows toward the byte budget.
    """
    if itemsize >= 4:
        c_mult = 8
    elif itemsize == 2:
        c_mult = 16
    else:
        c_mult = 32

    if C % c_mult == 0:
        tc = C
        # Split channels in two when each half still fills a budget block:
        # block bytes stay at budget (THW compensates) and the stats pass's
        # "parallel" axis gets extent >= 2 (shards across v7x's two TCs).
        if C >= 2 * c_mult and (C // 2) * HW * itemsize >= block_bytes:
            tc = (C // 2) // c_mult * c_mult
        # Guard: a single (tc, 128) column must fit the block budget.
        while tc > c_mult and tc * 128 * itemsize > block_bytes:
            tc = max(c_mult, (tc // 2) // c_mult * c_mult)
    else:
        # Block's second-to-last dim must be a packing multiple or the full
        # dim; THW below shrinks to compensate for a large forced tc.
        tc = C

    budget_elems = max(block_bytes // itemsize, 1)
    thw_cap = max(budget_elems // tc, 1)
    if HW <= thw_cap or HW <= 128:
        thw = HW
    else:
        thw = max((thw_cap // 128) * 128, 128)
    return tc, thw


# --------------------------------------------------------------------------
# Pallas kernels
# --------------------------------------------------------------------------

def _gbn_stats_kernel(x_ref, g_ref, b_ref, scale_ref, shift_ref,
                      sum_ref, sq_ref, *, c_total, hw_total, tc, thw,
                      m_total, eps, need_c_mask, need_hw_mask):
    """Pass 1: per-channel sum / sum-of-squares -> fused scale & shift."""
    ci = pl.program_id(0)
    n = pl.program_id(1)
    j = pl.program_id(2)

    @pl.when(jnp.logical_and(n == 0, j == 0))
    def _():
        sum_ref[...] = jnp.zeros_like(sum_ref)
        sq_ref[...] = jnp.zeros_like(sq_ref)

    x = x_ref[...].astype(jnp.float32)          # (tc, thw)

    def _accum(xv):
        sum_ref[...] += jnp.sum(xv, axis=1, keepdims=True)        # (tc, 1)
        sq_ref[...] += jnp.sum(xv * xv, axis=1, keepdims=True)    # (tc, 1)

    if need_c_mask or need_hw_mask:
        # Masking only on edge tiles; interior tiles take the cheap path.
        conds = []
        if need_hw_mask:
            conds.append(j == pl.num_programs(2) - 1)
        if need_c_mask:
            conds.append(ci == pl.num_programs(0) - 1)
        is_edge = conds[0]
        for c in conds[1:]:
            is_edge = jnp.logical_or(is_edge, c)

        @pl.when(is_edge)
        def _():
            mask = None
            if need_hw_mask:
                col = jax.lax.broadcasted_iota(jnp.int32, x.shape, 1)
                mask = (col + j * thw) < hw_total
            if need_c_mask:
                row = jax.lax.broadcasted_iota(jnp.int32, x.shape, 0)
                cm = (row + ci * tc) < c_total
                mask = cm if mask is None else jnp.logical_and(mask, cm)
            _accum(jnp.where(mask, x, 0.0))

        @pl.when(jnp.logical_not(is_edge))
        def _():
            _accum(x)
    else:
        _accum(x)

    @pl.when(jnp.logical_and(n == pl.num_programs(1) - 1,
                             j == pl.num_programs(2) - 1))
    def _():
        inv_m = 1.0 / m_total
        mean = sum_ref[...] * inv_m
        # clamp guards against catastrophic cancellation going negative
        var = jnp.maximum(sq_ref[...] * inv_m - mean * mean, 0.0)
        inv = jax.lax.rsqrt(var + eps)
        scale = g_ref[...].astype(jnp.float32) * inv
        scale_ref[...] = scale
        shift_ref[...] = b_ref[...].astype(jnp.float32) - mean * scale


def _gbn_apply_kernel(x_ref, scale_ref, shift_ref, o_ref, *, relu):
    """Pass 2: y = x*scale + shift (+ optional fused ReLU)."""
    x = x_ref[...].astype(jnp.float32)          # (tc, thw)
    y = x * scale_ref[...] + shift_ref[...]     # scale/shift are (tc, 1)
    if relu:
        y = jnp.maximum(y, 0.0)
    o_ref[...] = y.astype(o_ref.dtype)


def _gbn_fused_kernel(x_ref, g_ref, b_ref, o_ref, *, relu, eps, m_total):
    """Small-input fast path: stats + normalize in one kernel (x read once)."""
    x = x_ref[...].astype(jnp.float32)                       # (N, C, HW)
    s = jnp.sum(x, axis=2, keepdims=True)                    # (N, C, 1)
    s = jnp.sum(s, axis=0, keepdims=True)                    # (1, C, 1)
    sq = jnp.sum(x * x, axis=2, keepdims=True)
    sq = jnp.sum(sq, axis=0, keepdims=True)
    inv_m = 1.0 / m_total
    mean = s * inv_m
    var = jnp.maximum(sq * inv_m - mean * mean, 0.0)
    inv = jax.lax.rsqrt(var + eps)
    scale = g_ref[...].astype(jnp.float32) * inv             # (1, C, 1)
    shift = b_ref[...].astype(jnp.float32) - mean * scale
    y = x * scale + shift
    if relu:
        y = jnp.maximum(y, 0.0)
    o_ref[...] = y.astype(o_ref.dtype)


# --------------------------------------------------------------------------
# Forward
# --------------------------------------------------------------------------

def gbn_forward(x, gamma, beta, *, fuse_relu=False, eps=1e-5,
                block_bytes=None, allow_fused=True):
    """GBN forward: training-mode BatchNorm2d over (N,H,W) per channel,
    optionally fused with ReLU.  x is NCHW (PyTorch layout)."""
    N, C, H, W = x.shape
    HW = H * W
    itemsize = jnp.dtype(x.dtype).itemsize
    x3 = x.reshape(N, C, HW)                    # contiguous view, no copy
    m_total = float(N * HW)

    budget, vmem_limit = _vmem_budget()
    if block_bytes is None:
        block_bytes = budget

    # ---- fast path: whole activation fits comfortably in VMEM -------------
    if allow_fused and N * C * HW * 4 <= budget:
        g3 = gamma.reshape(1, C, 1).astype(jnp.float32)
        b3 = beta.reshape(1, C, 1).astype(jnp.float32)
        fused = functools.partial(_gbn_fused_kernel, relu=bool(fuse_relu),
                                  eps=float(eps), m_total=m_total)
        y3 = pl.pallas_call(
            fused,
            out_shape=jax.ShapeDtypeStruct((N, C, HW), x.dtype),
            compiler_params=pltpu.CompilerParams(
                vmem_limit_bytes=vmem_limit),
        )(x3, g3, b3)
        return y3.reshape(N, C, H, W)

    # ---- two-pass tiled path ----------------------------------------------
    g2 = gamma.reshape(C, 1).astype(jnp.float32)
    b2 = beta.reshape(C, 1).astype(jnp.float32)

    tc, thw = _choose_tiles(C, HW, itemsize, block_bytes)
    c_tiles = pl.cdiv(C, tc)
    hw_tiles = pl.cdiv(HW, thw)

    stats_kernel = functools.partial(
        _gbn_stats_kernel,
        c_total=C, hw_total=HW, tc=tc, thw=thw, m_total=m_total,
        eps=float(eps),
        need_c_mask=(C % tc != 0), need_hw_mask=(HW % thw != 0))

    x_spec = pl.BlockSpec((None, tc, thw), lambda ci, n, j: (n, ci, j))
    cvec_spec = pl.BlockSpec((tc, 1), lambda ci, n, j: (ci, 0))

    scale, shift = pl.pallas_call(
        stats_kernel,
        out_shape=(jax.ShapeDtypeStruct((C, 1), jnp.float32),
                   jax.ShapeDtypeStruct((C, 1), jnp.float32)),
        grid_spec=pltpu.PrefetchScalarGridSpec(
            num_scalar_prefetch=0,
            grid=(c_tiles, N, hw_tiles),
            in_specs=[x_spec, cvec_spec, cvec_spec],
            out_specs=(cvec_spec, cvec_spec),
            scratch_shapes=[pltpu.VMEM((tc, 1), jnp.float32),
                            pltpu.VMEM((tc, 1), jnp.float32)]),
        compiler_params=pltpu.CompilerParams(
            dimension_semantics=("parallel", "arbitrary", "arbitrary"),
            vmem_limit_bytes=vmem_limit),
    )(x3, g2, b2)

    apply_kernel = functools.partial(_gbn_apply_kernel, relu=bool(fuse_relu))
    y3 = pl.pallas_call(
        apply_kernel,
        out_shape=jax.ShapeDtypeStruct((N, C, HW), x.dtype),
        grid_spec=pltpu.PrefetchScalarGridSpec(
            num_scalar_prefetch=0,
            grid=(c_tiles, N, hw_tiles),
            in_specs=[x_spec, cvec_spec, cvec_spec],
            out_specs=x_spec),
        compiler_params=pltpu.CompilerParams(
            dimension_semantics=("parallel", "parallel", "parallel"),
            vmem_limit_bytes=vmem_limit),
    )(x3, scale, shift)

    return y3.reshape(N, C, H, W)


class GBN:
    """Pallas port of DeepCAM's GBN module (BatchNorm2d [+ fused ReLU])."""

    def __init__(self, num_features, fuse_relu=False, process_group=None,
                 enable_gbn=False, eps=1e-5):
        del process_group, enable_gbn  # single device: plain batch statistics
        self.num_features = num_features
        self.fuse_relu = bool(fuse_relu)
        self.eps = float(eps)
        # affine params (PyTorch init: weight=1, bias=0)
        self.gamma = jnp.ones((num_features,), jnp.float32)
        self.beta = jnp.zeros((num_features,), jnp.float32)
        # running stats kept for parity; not used by the training-mode forward
        self.running_mean = jnp.zeros((num_features,), jnp.float32)
        self.running_var = jnp.ones((num_features,), jnp.float32)
        self._fwd = jax.jit(functools.partial(
            gbn_forward, fuse_relu=self.fuse_relu, eps=self.eps))

    def __call__(self, x, z=None):
        del z
        return self._fwd(x, self.gamma, self.beta)


# --------------------------------------------------------------------------
# Reference + demo
# --------------------------------------------------------------------------

def _gbn_reference(x, gamma, beta, fuse_relu, eps=1e-5):
    mean = jnp.mean(x, axis=(0, 2, 3), keepdims=True)
    var = jnp.mean((x - mean) ** 2, axis=(0, 2, 3), keepdims=True)
    y = (x - mean) * jax.lax.rsqrt(var + eps)
    y = y * gamma.reshape(1, -1, 1, 1) + beta.reshape(1, -1, 1, 1)
    if fuse_relu:
        y = jnp.maximum(y, 0.0)
    return y


def _check(x, gamma, beta, fuse_relu, **kw):
    fwd = jax.jit(functools.partial(gbn_forward, fuse_relu=fuse_relu, **kw))
    out = jax.block_until_ready(fwd(x, gamma, beta))
    ref = _gbn_reference(x, gamma, beta, fuse_relu)
    assert out.shape == x.shape, out.shape
    assert bool(jnp.all(jnp.isfinite(out)))
    err = float(jnp.max(jnp.abs(out - ref)))
    assert err < 1e-3, err


if __name__ == "__main__":
    key = jax.random.PRNGKey(0)
    kx, kg, kb, kx2, kx3, kg3, kb3, kx4 = jax.random.split(key, 8)

    # A) fused fast path: batch=2, channels=32, spatial=16x16, both relu modes
    N, C, H, W = 2, 32, 16, 16
    x = jax.random.normal(kx, (N, C, H, W), jnp.float32) * 3.0 + 1.0
    gamma = 1.0 + 0.1 * jax.random.normal(kg, (C,), jnp.float32)
    beta = 0.1 * jax.random.normal(kb, (C,), jnp.float32)
    for fuse_relu in (False, True):
        _check(x, gamma, beta, fuse_relu)

    # B) forced tiled path with tiny block budget: exercises channel split,
    #    multi-tile accumulation, and HW + C edge masking (C=40, HW=144)
    xb = jax.random.normal(kx3, (2, 40, 12, 12), jnp.float32) * 2.0 - 0.5
    gb = 1.0 + 0.1 * jax.random.normal(kg3, (40,), jnp.float32)
    bb = 0.1 * jax.random.normal(kb3, (40,), jnp.float32)
    _check(xb, gb, bb, True, block_bytes=8192, allow_fused=False)

    # C) forced tiled path, channels=4 (non-multiple-of-8 channel dim)
    xc = jax.random.normal(kx2, (2, 4, 16, 16), jnp.float32)
    _check(xc, jnp.ones((4,), jnp.float32), jnp.zeros((4,), jnp.float32),
           False, block_bytes=8192, allow_fused=False)

    # D) default tiled path (default block budget / vmem limit)
    xd = jax.random.normal(kx4, (2, 64, 32, 32), jnp.float32) + 0.3
    _check(xd, jnp.ones((64,), jnp.float32), jnp.zeros((64,), jnp.float32),
           False, allow_fused=False)

    # E) module-style usage mirroring the PyTorch class (channels=4, ReLU)
    mod = GBN(4, fuse_relu=True)
    out_mod = jax.block_until_ready(mod(xc))
    assert out_mod.shape == xc.shape
    assert bool(jnp.all(out_mod >= 0.0))

    print("KERNEL_OK")
</pallas_src>

<mosaic_0001>
module attributes {stable_mosaic.version = 11 : i64} {
  func.func @_gbn_fused_kernel(%arg0: memref<2x32x256xf32, #tpu.memory_space<vmem>>, %arg1: memref<1x32x1xf32, #tpu.memory_space<vmem>>, %arg2: memref<1x32x1xf32, #tpu.memory_space<vmem>>, %arg3: memref<2x32x256xf32, #tpu.memory_space<vmem>>) attributes {dimension_semantics = [], scalar_prefetch = 0 : i64, scratch_operands = 0 : i64, tpu.core_type = #tpu.core_type<tc>} {
    %c0 = arith.constant 0 : index
    %c0_0 = arith.constant 0 : index
    %c0_1 = arith.constant 0 : index
    %0 = vector.load %arg0[%c0, %c0_0, %c0_1] : memref<2x32x256xf32, #tpu.memory_space<vmem>>, vector<2x32x256xf32>
    %cst = arith.constant dense<0.000000e+00> : vector<2x32xf32>
    %1 = vector.multi_reduction <add>, %0, %cst [2] : vector<2x32x256xf32> to vector<2x32xf32>
    %2 = vector.shape_cast %1 : vector<2x32xf32> to vector<2x32x1xf32>
    %cst_2 = arith.constant dense<0.000000e+00> : vector<32x1xf32>
    %3 = vector.multi_reduction <add>, %2, %cst_2 [0] : vector<2x32x1xf32> to vector<32x1xf32>
    %4 = vector.shape_cast %3 : vector<32x1xf32> to vector<1x32x1xf32>
    %5 = arith.mulf %0, %0 : vector<2x32x256xf32>
    %cst_3 = arith.constant dense<0.000000e+00> : vector<2x32xf32>
    %6 = vector.multi_reduction <add>, %5, %cst_3 [2] : vector<2x32x256xf32> to vector<2x32xf32>
    %7 = vector.shape_cast %6 : vector<2x32xf32> to vector<2x32x1xf32>
    %cst_4 = arith.constant dense<0.000000e+00> : vector<32x1xf32>
    %8 = vector.multi_reduction <add>, %7, %cst_4 [0] : vector<2x32x1xf32> to vector<32x1xf32>
    %9 = vector.shape_cast %8 : vector<32x1xf32> to vector<1x32x1xf32>
    %cst_5 = arith.constant 0.001953125 : f32
    %10 = vector.broadcast %cst_5 : f32 to vector<1x32x1xf32>
    %11 = arith.mulf %4, %10 : vector<1x32x1xf32>
    %cst_6 = arith.constant 0.001953125 : f32
    %12 = vector.broadcast %cst_6 : f32 to vector<1x32x1xf32>
    %13 = arith.mulf %9, %12 : vector<1x32x1xf32>
    %14 = arith.mulf %11, %11 : vector<1x32x1xf32>
    %15 = arith.subf %13, %14 : vector<1x32x1xf32>
    %cst_7 = arith.constant 0.000000e+00 : f32
    %16 = vector.broadcast %cst_7 : f32 to vector<1x32x1xf32>
    %17 = arith.maximumf %15, %16 : vector<1x32x1xf32>
    %cst_8 = arith.constant 9.99999974E-6 : f32
    %18 = vector.broadcast %cst_8 : f32 to vector<1x32x1xf32>
    %19 = arith.addf %17, %18 : vector<1x32x1xf32>
    %20 = math.rsqrt %19 : vector<1x32x1xf32>
    %c0_9 = arith.constant 0 : index
    %c0_10 = arith.constant 0 : index
    %c0_11 = arith.constant 0 : index
    %21 = vector.load %arg1[%c0_9, %c0_10, %c0_11] : memref<1x32x1xf32, #tpu.memory_space<vmem>>, vector<1x32x1xf32>
    %22 = arith.mulf %21, %20 : vector<1x32x1xf32>
    %c0_12 = arith.constant 0 : index
    %c0_13 = arith.constant 0 : index
    %c0_14 = arith.constant 0 : index
    %23 = vector.load %arg2[%c0_12, %c0_13, %c0_14] : memref<1x32x1xf32, #tpu.memory_space<vmem>>, vector<1x32x1xf32>
    %24 = arith.mulf %11, %22 : vector<1x32x1xf32>
    %25 = arith.subf %23, %24 : vector<1x32x1xf32>
    %26 = vector.broadcast %22 : vector<1x32x1xf32> to vector<2x32x256xf32>
    %27 = arith.mulf %0, %26 : vector<2x32x256xf32>
    %28 = vector.broadcast %25 : vector<1x32x1xf32> to vector<2x32x256xf32>
    %29 = arith.addf %27, %28 : vector<2x32x256xf32>
    %c0_15 = arith.constant 0 : index
    %c0_16 = arith.constant 0 : index
    %c0_17 = arith.constant 0 : index
    %30 = vector.load %arg3[%c0_15, %c0_16, %c0_17] : memref<2x32x256xf32, #tpu.memory_space<vmem>>, vector<2x32x256xf32>
    tpu.vector_store %arg3[%c0_15, %c0_16, %c0_17], %29 {strides = array<i32>} : memref<2x32x256xf32, #tpu.memory_space<vmem>>, vector<2x32x256xf32>,
    return
  }
}

</mosaic_0001>

<llo_original>
// kernel: gbn_forward.1
$region0: #{gbn_forward.1}
  #allocation0 [shape = 'u32[]', space=smem, size = 0x4, offset = 0x4, fixed_abs, tag = 'smem constant byte address 0x4 - core index']
  #allocation1 [shape = 'u32[72,128]{1,0:T(1,128)}', space=vmem, size = 0x9000, scoped, tag = 'internal scratch']
  %s0 = inlined_call_operand.vmem [shape: f32[2,32,256], index: 0, kind: input, shape index: {}]
  %s1 = inlined_call_operand.vmem [shape: f32[1,32,1], index: 1, kind: input, shape index: {}]
  %s2 = inlined_call_operand.vmem [shape: f32[1,32,1], index: 2, kind: input, shape index: {}]
  %s3 = inlined_call_operand.vmem [shape: f32[2,32,256], index: 3, kind: output, shape index: {}]
  %s4 = sld [smem:[#allocation0]]
  $region22: #{gbn_forward.1} parent=0
    _
  %s6 = ssub.s32 1, %s4
  %s7 = scalar_select 0, %s6, %s4
  // Predicated region
  $region2: #{gbn_forward.1} parent=0 // pred_check
    _
  $region3: #{gbn_forward.1} parent=0 // pred_check_branch
    %9 = sbr.rel (0) target = $region5
  $region4: #{gbn_forward.1} parent=0 // pred_region
    _
  $region5: #{gbn_forward.1} parent=0 // pred_fallthru
    _
  // Predicated region
  $region6: #{gbn_forward.1} parent=0 // pred_check
    _
  $region7: #{gbn_forward.1} parent=0 // pred_check_branch
    %11 = sbr.rel (0) target = $region9
  $region8: #{gbn_forward.1} parent=0 // pred_region
    _
  $region9: #{gbn_forward.1} parent=0 // pred_fallthru
    _
  // Predicated region
  $region10: #{gbn_forward.1} parent=0 // pred_check
    _
  $region11: #{gbn_forward.1} parent=0 // pred_check_branch
    %13 = sbr.rel (0) target = $region13
  $region12: #{gbn_forward.1} parent=0 // pred_region
    _
  $region13: #{gbn_forward.1} parent=0 // pred_fallthru
    _
  %v14 = vld [vmem:[%s0] sm:$0xff]
  %v15 = vld [vmem:[%s0 + $0x8] sm:$0xff]
  %v16 = vld [vmem:[%s0 + $0x10] sm:$0xff]
  %v17 = vld [vmem:[%s0 + $0x18] sm:$0xff]
  %v18 = vld [vmem:[%s0 + $0x20] sm:$0xff]
  %v19 = vld [vmem:[%s0 + $0x28] sm:$0xff]
  %v20 = vld [vmem:[%s0 + $0x30] sm:$0xff]
  %v21 = vld [vmem:[%s0 + $0x38] sm:$0xff]
  %v22 = vld [vmem:[%s0 + $0x40] sm:$0xff]
  %v23 = vld [vmem:[%s0 + $0x48] sm:$0xff]
  %v24 = vld [vmem:[%s0 + $0x50] sm:$0xff]
  %v25 = vld [vmem:[%s0 + $0x58] sm:$0xff]
  %v26 = vld [vmem:[%s0 + $0x60] sm:$0xff]
  %v27 = vld [vmem:[%s0 + $0x68] sm:$0xff]
  %v28 = vld [vmem:[%s0 + $0x70] sm:$0xff]
  %v29 = vld [vmem:[%s0 + $0x78] sm:$0xff]
  %v30 = vadd.f32 %v14, %v15
  %31 = vadd.xlane.f32.xlu0 %v30
  %v32 = vpop.xlane.xlu0 %31
  %v33 = vadd.f32 %v16, %v17
  %34 = vadd.xlane.f32.xlu0 %v33
  %v35 = vpop.xlane.xlu0 %34
  %v36 = vadd.f32 %v18, %v19
  %37 = vadd.xlane.f32.xlu0 %v36
  %v38 = vpop.xlane.xlu0 %37
  %v39 = vadd.f32 %v20, %v21
  %40 = vadd.xlane.f32.xlu0 %v39
  %v41 = vpop.xlane.xlu0 %40
  %v42 = vadd.f32 %v22, %v23
  %43 = vadd.xlane.f32.xlu0 %v42
  %v44 = vpop.xlane.xlu0 %43
  %v45 = vadd.f32 %v24, %v25
  %46 = vadd.xlane.f32.xlu0 %v45
  %v47 = vpop.xlane.xlu0 %46
  %v48 = vadd.f32 %v26, %v27
  %49 = vadd.xlane.f32.xlu0 %v48
  %v50 = vpop.xlane.xlu0 %49
  %v51 = vadd.f32 %v28, %v29
  %52 = vadd.xlane.f32.xlu0 %v51
  %v53 = vpop.xlane.xlu0 %52
  %v54 = vadd.f32 %v32, %v44
  %v55 = vadd.f32 %v35, %v47
  %v56 = vadd.f32 %v38, %v50
  %v57 = vadd.f32 %v41, %v53
  %v58 = vmul.f32 %v14, %v14
  %v59 = vmul.f32 %v15, %v15
  %v60 = vmul.f32 %v16, %v16
  %v61 = vmul.f32 %v17, %v17
  %v62 = vmul.f32 %v18, %v18
  %v63 = vmul.f32 %v19, %v19
  %v64 = vmul.f32 %v20, %v20
  %v65 = vmul.f32 %v21, %v21
  %v66 = vmul.f32 %v22, %v22
  %v67 = vmul.f32 %v23, %v23
  %v68 = vmul.f32 %v24, %v24
  %v69 = vmul.f32 %v25, %v25
  %v70 = vmul.f32 %v26, %v26
  %v71 = vmul.f32 %v27, %v27
  %v72 = vmul.f32 %v28, %v28
  %v73 = vmul.f32 %v29, %v29
  %v74 = vadd.f32 %v58, %v59
  %75 = vadd.xlane.f32.xlu0 %v74
  %v76 = vpop.xlane.xlu0 %75
  %v77 = vadd.f32 %v60, %v61
  %78 = vadd.xlane.f32.xlu0 %v77
  %v79 = vpop.xlane.xlu0 %78
  %v80 = vadd.f32 %v62, %v63
  %81 = vadd.xlane.f32.xlu0 %v80
  %v82 = vpop.xlane.xlu0 %81
  %v83 = vadd.f32 %v64, %v65
  %84 = vadd.xlane.f32.xlu0 %v83
  %v85 = vpop.xlane.xlu0 %84
  %v86 = vadd.f32 %v66, %v67
  %87 = vadd.xlane.f32.xlu0 %v86
  %v88 = vpop.xlane.xlu0 %87
  %v89 = vadd.f32 %v68, %v69
  %90 = vadd.xlane.f32.xlu0 %v89
  %v91 = vpop.xlane.xlu0 %90
  %v92 = vadd.f32 %v70, %v71
  %93 = vadd.xlane.f32.xlu0 %v92
  %v94 = vpop.xlane.xlu0 %93
  %v95 = vadd.f32 %v72, %v73
  %96 = vadd.xlane.f32.xlu0 %v95
  %v97 = vpop.xlane.xlu0 %96
  %v98 = vadd.f32 %v76, %v88
  %v99 = vadd.f32 %v79, %v91
  %v100 = vadd.f32 %v82, %v94
  %v101 = vadd.f32 %v85, %v97
  %v102 = vmul.f32 %v54, 0.001953125
  %v103 = vmul.f32 %v55, 0.001953125
  %v104 = vmul.f32 %v56, 0.001953125
  %v105 = vmul.f32 %v57, 0.001953125
  %v106 = vmul.f32 %v98, 0.001953125
  %v107 = vmul.f32 %v99, 0.001953125
  %v108 = vmul.f32 %v100, 0.001953125
  %v109 = vmul.f32 %v101, 0.001953125
  %v110 = vmul.f32 %v102, %v102
  %v111 = vmul.f32 %v103, %v103
  %v112 = vmul.f32 %v104, %v104
  %v113 = vmul.f32 %v105, %v105
  %v114 = vsub.f32 %v106, %v110
  %v115 = vsub.f32 %v107, %v111
  %v116 = vsub.f32 %v108, %v112
  %v117 = vsub.f32 %v109, %v113
  %v118 = vmax.f32 %v114, 0.0
  %v119 = vmax.f32 %v115, 0.0
  %v120 = vmax.f32 %v116, 0.0
  %v121 = vmax.f32 %v117, 0.0
  %v122 = vadd.f32 %v118, 1e-05
  %v123 = vadd.f32 %v119, 1e-05
  %v124 = vadd.f32 %v120, 1e-05
  %v125 = vadd.f32 %v121, 1e-05
  %v126 = vrsqrt.pop %v122
  %v127 = vmul.f32 %v126, %v122
  %v128 = vmul.f32 %v127, %v126
  %v129 = vmul.f32 0.5, %v128
  %v130 = vsub.f32 1.5, %v129
  %v131 = vmul.f32 %v126, %v130
  %vm132 = vweird.f32 %v122
  %vm133 = vweird.f32 %v126
  %vm134 = vmor %vm132, %vm133
  %v135 = vsel %vm134, %v126, %v131
  %v136 = vrsqrt.pop %v123
  %v137 = vmul.f32 %v136, %v123
  %v138 = vmul.f32 %v137, %v136
  %v139 = vmul.f32 0.5, %v138
  %v140 = vsub.f32 1.5, %v139
  %v141 = vmul.f32 %v136, %v140
  %vm142 = vweird.f32 %v123
  %vm143 = vweird.f32 %v136
  %vm144 = vmor %vm142, %vm143
  %v145 = vsel %vm144, %v136, %v141
  %v146 = vrsqrt.pop %v124
  %v147 = vmul.f32 %v146, %v124
  %v148 = vmul.f32 %v147, %v146
  %v149 = vmul.f32 0.5, %v148
  %v150 = vsub.f32 1.5, %v149
  %v151 = vmul.f32 %v146, %v150
  %vm152 = vweird.f32 %v124
  %vm153 = vweird.f32 %v146
  %vm154 = vmor %vm152, %vm153
  %v155 = vsel %vm154, %v146, %v151
  %v156 = vrsqrt.pop %v125
  %v157 = vmul.f32 %v156, %v125
  %v158 = vmul.f32 %v157, %v156
  %v159 = vmul.f32 0.5, %v158
  %v160 = vsub.f32 1.5, %v159
  %v161 = vmul.f32 %v156, %v160
  %vm162 = vweird.f32 %v125
  %vm163 = vweird.f32 %v156
  %vm164 = vmor %vm162, %vm163
  %v165 = vsel %vm164, %v156, %v161
  %v166 = vld [vmem:[%s1] sm:$0xff]
  %v167 = vld [vmem:[%s1 + $0x8] sm:$0xff]
  %v168 = vld [vmem:[%s1 + $0x10] sm:$0xff]
  %v169 = vld [vmem:[%s1 + $0x18] sm:$0xff]
  %v170 = vmul.f32 %v166, %v135
  %v171 = vmul.f32 %v167, %v145
  %v172 = vmul.f32 %v168, %v155
  %v173 = vmul.f32 %v169, %v165
  %v174 = vld [vmem:[%s2] sm:$0xff]
  %v175 = vld [vmem:[%s2 + $0x8] sm:$0xff]
  %v176 = vld [vmem:[%s2 + $0x10] sm:$0xff]
  %v177 = vld [vmem:[%s2 + $0x18] sm:$0xff]
  %v178 = vmul.f32 %v102, %v170
  %v179 = vmul.f32 %v103, %v171
  %v180 = vmul.f32 %v104, %v172
  %v181 = vmul.f32 %v105, %v173
  %v182 = vsub.f32 %v174, %v178
  %v183 = vsub.f32 %v175, %v179
  %v184 = vsub.f32 %v176, %v180
  %v185 = vsub.f32 %v177, %v181
  %187 = vset.pattern.permute.xlu0 0
  %188 = vperm.xlu0 %187, %v170
  %v189 = vpop.permute.xlu0 %188
  %192 = vset.pattern.permute.xlu0 0
  %193 = vperm.xlu0 %192, %v171
  %v194 = vpop.permute.xlu0 %193
  %197 = vset.pattern.permute.xlu0 0
  %198 = vperm.xlu0 %197, %v172
  %v199 = vpop.permute.xlu0 %198
  %202 = vset.pattern.permute.xlu0 0
  %203 = vperm.xlu0 %202, %v173
  %v204 = vpop.permute.xlu0 %203
  %v206 = vmul.f32 %v14, %v189
  %v207 = vmul.f32 %v15, %v189
  %v208 = vmul.f32 %v16, %v194
  %v209 = vmul.f32 %v17, %v194
  %v210 = vmul.f32 %v18, %v199
  %v211 = vmul.f32 %v19, %v199
  %v212 = vmul.f32 %v20, %v204
  %v213 = vmul.f32 %v21, %v204
  %v214 = vmul.f32 %v22, %v189
  %v215 = vmul.f32 %v23, %v189
  %v216 = vmul.f32 %v24, %v194
  %v217 = vmul.f32 %v25, %v194
  %v218 = vmul.f32 %v26, %v199
  %v219 = vmul.f32 %v27, %v199
  %v220 = vmul.f32 %v28, %v204
  %v221 = vmul.f32 %v29, %v204
  %223 = vset.pattern.permute.xlu0 0
  %224 = vperm.xlu0 %223, %v182
  %v225 = vpop.permute.xlu0 %224
  %228 = vset.pattern.permute.xlu0 0
  %229 = vperm.xlu0 %228, %v183
  %v230 = vpop.permute.xlu0 %229
  %233 = vset.pattern.permute.xlu0 0
  %234 = vperm.xlu0 %233, %v184
  %v235 = vpop.permute.xlu0 %234
  %238 = vset.pattern.permute.xlu0 0
  %239 = vperm.xlu0 %238, %v185
  %v240 = vpop.permute.xlu0 %239
  %v242 = vadd.f32 %v206, %v225
  %v243 = vadd.f32 %v207, %v225
  %v244 = vadd.f32 %v208, %v230
  %v245 = vadd.f32 %v209, %v230
  %v246 = vadd.f32 %v210, %v235
  %v247 = vadd.f32 %v211, %v235
  %v248 = vadd.f32 %v212, %v240
  %v249 = vadd.f32 %v213, %v240
  %v250 = vadd.f32 %v214, %v225
  %v251 = vadd.f32 %v215, %v225
  %v252 = vadd.f32 %v216, %v230
  %v253 = vadd.f32 %v217, %v230
  %v254 = vadd.f32 %v218, %v235
  %v255 = vadd.f32 %v219, %v235
  %v256 = vadd.f32 %v220, %v240
  %v257 = vadd.f32 %v221, %v240
  %258 = vst [vmem:[%s3] sm:$0xff] %v242
  %259 = vst [vmem:[%s3 + $0x8] sm:$0xff] %v243
  %260 = vst [vmem:[%s3 + $0x10] sm:$0xff] %v244
  %261 = vst [vmem:[%s3 + $0x18] sm:$0xff] %v245
  %262 = vst [vmem:[%s3 + $0x20] sm:$0xff] %v246
  %263 = vst [vmem:[%s3 + $0x28] sm:$0xff] %v247
  %264 = vst [vmem:[%s3 + $0x30] sm:$0xff] %v248
  %265 = vst [vmem:[%s3 + $0x38] sm:$0xff] %v249
  %266 = vst [vmem:[%s3 + $0x40] sm:$0xff] %v250
  %267 = vst [vmem:[%s3 + $0x48] sm:$0xff] %v251
  %268 = vst [vmem:[%s3 + $0x50] sm:$0xff] %v252
  %269 = vst [vmem:[%s3 + $0x58] sm:$0xff] %v253
  %270 = vst [vmem:[%s3 + $0x60] sm:$0xff] %v254
  %271 = vst [vmem:[%s3 + $0x68] sm:$0xff] %v255
  %272 = vst [vmem:[%s3 + $0x70] sm:$0xff] %v256
  %273 = vst [vmem:[%s3 + $0x78] sm:$0xff] %v257
  // Predicated region
  $region14: #{gbn_forward.1} parent=0 // pred_check
    _
  $region15: #{gbn_forward.1} parent=0 // pred_check_branch
    %275 = sbr.rel (0) target = $region17
  $region16: #{gbn_forward.1} parent=0 // pred_region
    _
  $region17: #{gbn_forward.1} parent=0 // pred_fallthru
    _
  // Predicated region
  $region18: #{gbn_forward.1} parent=0 // pred_check
    _
  $region19: #{gbn_forward.1} parent=0 // pred_check_branch
    %277 = sbr.rel (0) target = $region21
  $region20: #{gbn_forward.1} parent=0 // pred_region
    _
  $region21: #{gbn_forward.1} parent=0 // pred_fallthru
    _

</llo_original>
